<compile_context>
chip_gen: v6e
topology: v6e:2x2x1
jax: 0.10.0
libtpu: 0.0.40
codegen_flags: <defaults>
</compile_context>

<pallas_src>
import math

import jax
import jax.numpy as jnp
from jax.experimental import pallas as pl
from jax.experimental.pallas import tpu as pltpu

BN_EPS = 1e-5
LANE = 128
SUBLANE = 8


def _round_up(n, m):
    return ((n + m - 1) // m) * m


def _default_compute_dtype():
    """bf16 on MXU-bf16-native generations (v6e/v7x), f32 on v5e and older."""
    try:
        kind = jax.devices()[0].device_kind.lower()
    except Exception:
        return jnp.float32
    for old in ("v2", "v3", "v4", "v5"):
        if old in kind:
            return jnp.float32
    return jnp.bfloat16


# ----------------------------------------------------------------------------- kernel
def _mlp_kernel(x_ref,
                w1_ref, b1_ref,
                w2_ref, b2_ref,
                w3_ref, b3_ref,
                w4_ref, b4_ref,
                o_ref):
    """Fused 4-layer MLP.  BatchNorm is pre-folded into (w, b); dropout is
    identity (eval mode), so each hidden layer is matmul + bias + ReLU."""
    compute_dtype = w1_ref.dtype

    def layer(h, w_ref, b_ref, relu):
        y = jnp.dot(h, w_ref[...], preferred_element_type=jnp.float32)
        y = y + b_ref[...]                      # bias kept in f32
        if relu:
            y = jnp.maximum(y, 0.0)
        return y

    h = x_ref[...]
    h = layer(h, w1_ref, b1_ref, True).astype(compute_dtype)
    h = layer(h, w2_ref, b2_ref, True).astype(compute_dtype)
    h = layer(h, w3_ref, b3_ref, True).astype(compute_dtype)
    out = layer(h, w4_ref, b4_ref, False)
    o_ref[...] = out.astype(o_ref.dtype)


# ----------------------------------------------------------------------------- wrapper
def _fold_and_pad_params(params, compute_dtype):
    """Fold eval-mode BN into Linear (W' = W*g*rsqrt(v+eps),
    b' = (b-m)*g*rsqrt(v+eps)+beta) and zero-pad every layer-output dim up to
    a multiple of 128 lanes (also padding the next layer's input rows)."""
    folded = []
    for idx in range(1, 5):
        w = params[f"w{idx}"].astype(jnp.float32)
        b = params[f"b{idx}"].astype(jnp.float32)          # (1, out)
        if f"g{idx}" in params:                            # hidden layer: fold BN
            scale = params[f"g{idx}"] * jax.lax.rsqrt(params[f"v{idx}"] + BN_EPS)
            w = w * scale                                  # per-output-column scale
            b = (b - params[f"m{idx}"]) * scale + params[f"be{idx}"]
        folded.append((w, b))

    padded = []
    prev_out_pad = None
    for w, b in folded:
        fan_in, fan_out = w.shape
        out_pad = _round_up(fan_out, LANE)
        in_pad = fan_in if prev_out_pad is None else prev_out_pad
        w_p = jnp.zeros((in_pad, out_pad), jnp.float32).at[:fan_in, :fan_out].set(w)
        b_p = jnp.zeros((1, out_pad), jnp.float32).at[:, :fan_out].set(b)
        padded.append((w_p.astype(compute_dtype), b_p))    # weights -> compute dtype, bias f32
        prev_out_pad = out_pad
    return padded


def crisis_embedding_forward(x, params, *, batch_tile=512, compute_dtype=None):
    """x: (B, input_dim) float32. params: dict of weights (see init_params)."""
    if compute_dtype is None:
        compute_dtype = _default_compute_dtype()
    compute_dtype = jnp.dtype(compute_dtype)

    B, in_dim = x.shape
    emb = params["w4"].shape[1]

    layers = _fold_and_pad_params(params, compute_dtype)
    emb_pad = layers[-1][0].shape[1]

    # ---- choose the batch tile ---------------------------------------------
    pb = _round_up(B, SUBLANE)
    tile = max(SUBLANE, (int(batch_tile) // SUBLANE) * SUBLANE)
    tile = min(tile, 1024)                 # keep double-buffered tiles well inside VMEM (v7x: 64 MiB)
    tile = min(tile, pb)
    # prefer >= 2 grid steps when the batch allows it (v7x has 2 TensorCores)
    if pb >= 2 * SUBLANE and tile > pb // 2:
        tile = max(SUBLANE, _round_up(pb // 2, SUBLANE))
    grid = pl.cdiv(pb, tile)
    b_pad = grid * tile

    x_p = x.astype(compute_dtype)
    if b_pad != B:
        x_p = jnp.zeros((b_pad, in_dim), compute_dtype).at[:B].set(x_p)

    # ---- operands / block specs --------------------------------------------
    operands = [x_p]
    in_specs = [pl.BlockSpec((tile, in_dim), lambda i: (i, 0))]
    for w, b in layers:
        operands += [w, b]
        in_specs.append(pl.BlockSpec(w.shape, lambda i: (0, 0)))   # weights resident
        in_specs.append(pl.BlockSpec(b.shape, lambda i: (0, 0)))

    # ---- cost estimate & VMEM sizing ---------------------------------------
    dims = [in_dim] + [w.shape[1] for w, _ in layers]
    flops = 2 * b_pad * sum(d0 * d1 for d0, d1 in zip(dims[:-1], dims[1:]))
    weight_bytes = sum(w.size * w.dtype.itemsize + b.size * b.dtype.itemsize
                       for w, b in layers)
    bytes_accessed = (x_p.size * compute_dtype.itemsize
                      + b_pad * emb_pad * 4
                      + weight_bytes)
    act_bytes = tile * (in_dim * compute_dtype.itemsize + emb_pad * 4)
    inter_bytes = 2 * tile * max(dims[1:]) * 4
    vmem_limit = int(min(120 * 1024 * 1024,
                         max(32 * 1024 * 1024,
                             2 * (2 * act_bytes + weight_bytes + inter_bytes))))

    out = pl.pallas_call(
        _mlp_kernel,
        out_shape=jax.ShapeDtypeStruct((b_pad, emb_pad), jnp.float32),
        grid_spec=pltpu.PrefetchScalarGridSpec(
            num_scalar_prefetch=0,
            grid=(grid,),
            in_specs=in_specs,
            out_specs=pl.BlockSpec((tile, emb_pad), lambda i: (i, 0)),
        ),
        compiler_params=pltpu.CompilerParams(
            dimension_semantics=("parallel",),
            vmem_limit_bytes=vmem_limit),
        cost_estimate=pl.CostEstimate(
            flops=flops, transcendentals=0, bytes_accessed=bytes_accessed),
    )(*operands)

    return out[:B, :emb]


# ----------------------------------------------------------------------------- params / reference
def init_params(key, input_dim, embedding_dim=128, hidden_dims=(256, 128, 64)):
    """Deterministic parameter init matching the module's __init__ shapes.
    Linear: xavier_uniform weights, zero bias.
    BatchNorm1d: gamma=1, beta=0, running_mean=0, running_var=1 (PyTorch defaults).
    Weights stored as (in_features, out_features) so y = x @ W + b."""
    dims = [input_dim, *hidden_dims, embedding_dim]
    params = {}
    keys = jax.random.split(key, len(dims) - 1)
    for idx, (fan_in, fan_out) in enumerate(zip(dims[:-1], dims[1:]), start=1):
        bound = math.sqrt(6.0 / (fan_in + fan_out))  # xavier_uniform
        w = jax.random.uniform(keys[idx - 1], (fan_in, fan_out),
                               minval=-bound, maxval=bound, dtype=jnp.float32)
        params[f"w{idx}"] = w
        params[f"b{idx}"] = jnp.zeros((1, fan_out), jnp.float32)
        if idx <= len(hidden_dims):  # BN only on hidden layers
            params[f"g{idx}"] = jnp.ones((1, fan_out), jnp.float32)
            params[f"be{idx}"] = jnp.zeros((1, fan_out), jnp.float32)
            params[f"m{idx}"] = jnp.zeros((1, fan_out), jnp.float32)
            params[f"v{idx}"] = jnp.ones((1, fan_out), jnp.float32)
    return params


def reference_forward(x, params):
    """Pure-JAX reference of the eval-mode forward pass (unfolded BN)."""
    h = x
    for idx in (1, 2, 3):
        h = h @ params[f"w{idx}"] + params[f"b{idx}"]
        inv = jax.lax.rsqrt(params[f"v{idx}"] + BN_EPS)
        h = (h - params[f"m{idx}"]) * inv * params[f"g{idx}"] + params[f"be{idx}"]
        h = jnp.maximum(h, 0.0)
    return h @ params["w4"] + params["b4"]


# ----------------------------------------------------------------------------- main
if __name__ == "__main__":
    key = jax.random.PRNGKey(0)
    k_param, k_x = jax.random.split(key)

    input_dim = 32
    embedding_dim = 128
    batch = 10   # deliberately NOT a multiple of the tile: exercises cdiv + padding

    params = init_params(k_param, input_dim, embedding_dim)
    x = jax.random.normal(k_x, (batch, input_dim), dtype=jnp.float32)

    ref = reference_forward(x, params)

    # f32 path: validates BN folding + lane padding + batch padding exactly.
    out_f32 = jax.block_until_ready(
        crisis_embedding_forward(x, params, batch_tile=256,
                                 compute_dtype=jnp.float32))
    assert out_f32.shape == (batch, embedding_dim)
    assert jnp.allclose(out_f32, ref, atol=1e-4, rtol=1e-4), "f32 mismatch vs reference"

    # bf16 fast path (v6e/v7x): f32 MXU accumulation, loose tolerance vs f32 ref.
    out_bf16 = jax.block_until_ready(
        crisis_embedding_forward(x, params, batch_tile=256,
                                 compute_dtype=jnp.bfloat16))
    assert out_bf16.shape == (batch, embedding_dim)
    assert jnp.allclose(out_bf16, ref, atol=1e-1, rtol=1e-1), "bf16 mismatch vs reference"

    print("KERNEL_OK")
</pallas_src>

<mosaic_0001>
module attributes {stable_mosaic.version = 11 : i64} {
  func.func @_mlp_kernel(%arg0: i32, %arg1: memref<8x32xf32, #tpu.memory_space<vmem>>, %arg2: memref<32x256xf32, #tpu.memory_space<vmem>>, %arg3: memref<1x256xf32, #tpu.memory_space<vmem>>, %arg4: memref<256x128xf32, #tpu.memory_space<vmem>>, %arg5: memref<1x128xf32, #tpu.memory_space<vmem>>, %arg6: memref<128x128xf32, #tpu.memory_space<vmem>>, %arg7: memref<1x128xf32, #tpu.memory_space<vmem>>, %arg8: memref<128x128xf32, #tpu.memory_space<vmem>>, %arg9: memref<1x128xf32, #tpu.memory_space<vmem>>, %arg10: memref<8x128xf32, #tpu.memory_space<vmem>>) attributes {dimension_semantics = [#tpu.dimension_semantics<parallel>], iteration_bounds = array<i64: 2>, scalar_prefetch = 0 : i64, scratch_operands = 0 : i64, tpu.core_type = #tpu.core_type<tc>, window_params = [{transform_indices = @transform_0, window_bounds = array<i64: 8, 32>}, {pipeline_mode = #tpu.pipeline_mode<synchronous>, transform_indices = @transform_1, window_bounds = array<i64: 32, 256>}, {pipeline_mode = #tpu.pipeline_mode<synchronous>, transform_indices = @transform_2, window_bounds = array<i64: 1, 256>}, {pipeline_mode = #tpu.pipeline_mode<synchronous>, transform_indices = @transform_3, window_bounds = array<i64: 256, 128>}, {pipeline_mode = #tpu.pipeline_mode<synchronous>, transform_indices = @transform_4, window_bounds = array<i64: 1, 128>}, {pipeline_mode = #tpu.pipeline_mode<synchronous>, transform_indices = @transform_5, window_bounds = array<i64: 128, 128>}, {pipeline_mode = #tpu.pipeline_mode<synchronous>, transform_indices = @transform_6, window_bounds = array<i64: 1, 128>}, {pipeline_mode = #tpu.pipeline_mode<synchronous>, transform_indices = @transform_7, window_bounds = array<i64: 128, 128>}, {pipeline_mode = #tpu.pipeline_mode<synchronous>, transform_indices = @transform_8, window_bounds = array<i64: 1, 128>}, {transform_indices = @transform_9, window_bounds = array<i64: 8, 128>}]} {
    %c0 = arith.constant 0 : index
    %c0_0 = arith.constant 0 : index
    %0 = vector.load %arg1[%c0, %c0_0] : memref<8x32xf32, #tpu.memory_space<vmem>>, vector<8x32xf32>
    %c0_1 = arith.constant 0 : index
    %c0_2 = arith.constant 0 : index
    %1 = vector.load %arg2[%c0_1, %c0_2] : memref<32x256xf32, #tpu.memory_space<vmem>>, vector<32x256xf32>
    %cst = arith.constant dense<0.000000e+00> : vector<8x256xf32>
    %2 = tpu.matmul %0, %1, %cst {dimension_numbers = #tpu.dot_dimension_numbers<[1], [0], [0], [1], [0, 0, 1, 1], [], []>} : vector<8x32xf32>, vector<32x256xf32>, vector<8x256xf32> -> vector<8x256xf32>
    %c0_3 = arith.constant 0 : index
    %c0_4 = arith.constant 0 : index
    %3 = vector.load %arg3[%c0_3, %c0_4] : memref<1x256xf32, #tpu.memory_space<vmem>>, vector<1x256xf32>
    %4 = vector.broadcast %3 : vector<1x256xf32> to vector<8x256xf32>
    %5 = arith.addf %2, %4 : vector<8x256xf32>
    %cst_5 = arith.constant 0.000000e+00 : f32
    %6 = vector.broadcast %cst_5 : f32 to vector<8x256xf32>
    %7 = arith.maximumf %5, %6 : vector<8x256xf32>
    %c0_6 = arith.constant 0 : index
    %c0_7 = arith.constant 0 : index
    %8 = vector.load %arg4[%c0_6, %c0_7] : memref<256x128xf32, #tpu.memory_space<vmem>>, vector<256x128xf32>
    %cst_8 = arith.constant dense<0.000000e+00> : vector<8x128xf32>
    %9 = tpu.matmul %7, %8, %cst_8 {dimension_numbers = #tpu.dot_dimension_numbers<[1], [0], [0], [1], [0, 0, 1, 1], [], []>} : vector<8x256xf32>, vector<256x128xf32>, vector<8x128xf32> -> vector<8x128xf32>
    %c0_9 = arith.constant 0 : index
    %c0_10 = arith.constant 0 : index
    %10 = vector.load %arg5[%c0_9, %c0_10] : memref<1x128xf32, #tpu.memory_space<vmem>>, vector<1x128xf32>
    %11 = vector.broadcast %10 : vector<1x128xf32> to vector<8x128xf32>
    %12 = arith.addf %9, %11 : vector<8x128xf32>
    %cst_11 = arith.constant 0.000000e+00 : f32
    %13 = vector.broadcast %cst_11 : f32 to vector<8x128xf32>
    %14 = arith.maximumf %12, %13 : vector<8x128xf32>
    %c0_12 = arith.constant 0 : index
    %c0_13 = arith.constant 0 : index
    %15 = vector.load %arg6[%c0_12, %c0_13] : memref<128x128xf32, #tpu.memory_space<vmem>>, vector<128x128xf32>
    %cst_14 = arith.constant dense<0.000000e+00> : vector<8x128xf32>
    %16 = tpu.matmul %14, %15, %cst_14 {dimension_numbers = #tpu.dot_dimension_numbers<[1], [0], [0], [1], [0, 0, 1, 1], [], []>} : vector<8x128xf32>, vector<128x128xf32>, vector<8x128xf32> -> vector<8x128xf32>
    %c0_15 = arith.constant 0 : index
    %c0_16 = arith.constant 0 : index
    %17 = vector.load %arg7[%c0_15, %c0_16] : memref<1x128xf32, #tpu.memory_space<vmem>>, vector<1x128xf32>
    %18 = vector.broadcast %17 : vector<1x128xf32> to vector<8x128xf32>
    %19 = arith.addf %16, %18 : vector<8x128xf32>
    %cst_17 = arith.constant 0.000000e+00 : f32
    %20 = vector.broadcast %cst_17 : f32 to vector<8x128xf32>
    %21 = arith.maximumf %19, %20 : vector<8x128xf32>
    %c0_18 = arith.constant 0 : index
    %c0_19 = arith.constant 0 : index
    %22 = vector.load %arg8[%c0_18, %c0_19] : memref<128x128xf32, #tpu.memory_space<vmem>>, vector<128x128xf32>
    %cst_20 = arith.constant dense<0.000000e+00> : vector<8x128xf32>
    %23 = tpu.matmul %21, %22, %cst_20 {dimension_numbers = #tpu.dot_dimension_numbers<[1], [0], [0], [1], [0, 0, 1, 1], [], []>} : vector<8x128xf32>, vector<128x128xf32>, vector<8x128xf32> -> vector<8x128xf32>
    %c0_21 = arith.constant 0 : index
    %c0_22 = arith.constant 0 : index
    %24 = vector.load %arg9[%c0_21, %c0_22] : memref<1x128xf32, #tpu.memory_space<vmem>>, vector<1x128xf32>
    %25 = vector.broadcast %24 : vector<1x128xf32> to vector<8x128xf32>
    %26 = arith.addf %23, %25 : vector<8x128xf32>
    %c0_23 = arith.constant 0 : index
    %c0_24 = arith.constant 0 : index
    %27 = vector.load %arg10[%c0_23, %c0_24] : memref<8x128xf32, #tpu.memory_space<vmem>>, vector<8x128xf32>
    tpu.vector_store %arg10[%c0_23, %c0_24], %26 {strides = array<i32>} : memref<8x128xf32, #tpu.memory_space<vmem>>, vector<8x128xf32>,
    return
  }
  func.func @transform_0(%arg0: i32) -> (i32, i32) {
    %c0_i32 = arith.constant 0 : i32
    %c0_i32_0 = arith.constant 0 : i32
    return %arg0, %c0_i32 : i32, i32
  }
  func.func @transform_1(%arg0: i32) -> (i32, i32) {
    %c0_i32 = arith.constant 0 : i32
    %c0_i32_0 = arith.constant 0 : i32
    %c0_i32_1 = arith.constant 0 : i32
    return %c0_i32, %c0_i32_0 : i32, i32
  }
  func.func @transform_2(%arg0: i32) -> (i32, i32) {
    %c0_i32 = arith.constant 0 : i32
    %c0_i32_0 = arith.constant 0 : i32
    %c0_i32_1 = arith.constant 0 : i32
    return %c0_i32, %c0_i32_0 : i32, i32
  }
  func.func @transform_3(%arg0: i32) -> (i32, i32) {
    %c0_i32 = arith.constant 0 : i32
    %c0_i32_0 = arith.constant 0 : i32
    %c0_i32_1 = arith.constant 0 : i32
    return %c0_i32, %c0_i32_0 : i32, i32
  }
  func.func @transform_4(%arg0: i32) -> (i32, i32) {
    %c0_i32 = arith.constant 0 : i32
    %c0_i32_0 = arith.constant 0 : i32
    %c0_i32_1 = arith.constant 0 : i32
    return %c0_i32, %c0_i32_0 : i32, i32
  }
  func.func @transform_5(%arg0: i32) -> (i32, i32) {
    %c0_i32 = arith.constant 0 : i32
    %c0_i32_0 = arith.constant 0 : i32
    %c0_i32_1 = arith.constant 0 : i32
    return %c0_i32, %c0_i32_0 : i32, i32
  }
  func.func @transform_6(%arg0: i32) -> (i32, i32) {
    %c0_i32 = arith.constant 0 : i32
    %c0_i32_0 = arith.constant 0 : i32
    %c0_i32_1 = arith.constant 0 : i32
    return %c0_i32, %c0_i32_0 : i32, i32
  }
  func.func @transform_7(%arg0: i32) -> (i32, i32) {
    %c0_i32 = arith.constant 0 : i32
    %c0_i32_0 = arith.constant 0 : i32
    %c0_i32_1 = arith.constant 0 : i32
    return %c0_i32, %c0_i32_0 : i32, i32
  }
  func.func @transform_8(%arg0: i32) -> (i32, i32) {
    %c0_i32 = arith.constant 0 : i32
    %c0_i32_0 = arith.constant 0 : i32
    %c0_i32_1 = arith.constant 0 : i32
    return %c0_i32, %c0_i32_0 : i32, i32
  }
  func.func @transform_9(%arg0: i32) -> (i32, i32) {
    %c0_i32 = arith.constant 0 : i32
    %c0_i32_0 = arith.constant 0 : i32
    return %arg0, %c0_i32 : i32, i32
  }
}

</mosaic_0001>

<llo_original>
// kernel: tpu_custom_call.1
$region0: #{tpu_custom_call.1}
  #allocation0 [shape = 'u32[]', space=smem, size = 0x4, offset = 0x4, fixed_abs, tag = 'smem constant byte address 0x4 - core index']
  #allocation1 [shape = 'u32[144,128]{1,0:T(1,128)}', space=vmem, size = 0x12000, scoped, tag = 'internal scratch']
  %s0 = inlined_call_operand.hbm [shape: f32[16,32], index: 0, kind: input, shape index: {}]
  %s1 = inlined_call_operand.hbm [shape: f32[32,256], index: 1, kind: input, shape index: {}]
  %s2 = inlined_call_operand.vmem [shape: f32[1,256], index: 2, kind: input, shape index: {}]
  %s3 = inlined_call_operand.hbm [shape: f32[256,128], index: 3, kind: input, shape index: {}]
  %s4 = inlined_call_operand.vmem [shape: f32[1,128], index: 4, kind: input, shape index: {}]
  %s5 = inlined_call_operand.hbm [shape: f32[128,128], index: 5, kind: input, shape index: {}]
  %s6 = inlined_call_operand.vmem [shape: f32[1,128], index: 6, kind: input, shape index: {}]
  %s7 = inlined_call_operand.hbm [shape: f32[128,128], index: 7, kind: input, shape index: {}]
  %s8 = inlined_call_operand.vmem [shape: f32[1,128], index: 8, kind: input, shape index: {}]
  %s9 = inlined_call_operand.hbm [shape: f32[16,128], index: 9, kind: output, shape index: {}]
  %s10 = sld [smem:[#allocation0]]
  $region89: #{tpu_custom_call.1} parent=0
    _
  %s12 = ssub.s32 1, %s10
  %s13 = scalar_select 0, %s12, %s10
  $region1: #{tpu_custom_call.1} parent=0
    #allocation2 [shape = 'u8[8192]{0}', space=vmem, size = 0x2000, scoped, tag = 'input window, operand 0']
    #allocation3 [shape = 's32[2]{0}', space=sflag, size = 0x8, scoped, tag = 'scoped memory for tpu_custom_call.1']
    #allocation4 [shape = 's32[2]{0}', space=sflag, size = 0x8, scoped, tag = 'scoped memory for tpu_custom_call.1']
    #allocation5 [shape = 'u8[32768]{0}', space=vmem, size = 0x8000, scoped, tag = 'input window, operand 1, single buffered']
    #allocation6 [shape = 's32[1]{0}', space=sflag, size = 0x4, scoped, tag = 'scoped memory for tpu_custom_call.1']
    #allocation7 [shape = 'u8[131072]{0}', space=vmem, size = 0x20000, scoped, tag = 'input window, operand 3, single buffered']
    #allocation8 [shape = 'u8[65536]{0}', space=vmem, size = 0x10000, scoped, tag = 'input window, operand 5, single buffered']
    #allocation9 [shape = 's32[1]{0}', space=sflag, size = 0x4, scoped, tag = 'scoped memory for tpu_custom_call.1']
    #allocation10 [shape = 'u8[65536]{0}', space=vmem, size = 0x10000, scoped, tag = 'input window, operand 7, single buffered']
    #allocation11 [shape = 'u8[8192]{0}', space=vmem, size = 0x2000, scoped, tag = 'output window, operand 0']
    %14 = vsyncpa [#allocation3], 0
    %s15 = scalar_lea.sflag [#allocation3], 1
    %16 = vsyncpa %s15, 0
    %17 = vsyncpa [#allocation6], 0
    %18 = vsyncpa [#allocation9], 0
    %19 = vsyncpa [#allocation4], 0
    %s20 = scalar_lea.sflag [#allocation4], 1
    %21 = vsyncpa %s20, 0
    loop: start=0, step=1, limit=4
    $region2: #{tpu_custom_call.1} parent=1 // loop_pre_header
      _
    $region3: #{tpu_custom_call.1} parent=1 // loop_header
      %s23 = sphi 0, %s27
      %p24 = scmp.ge.s32.totalorder %s23, 4
      %s33 = sphi 0, %s35
      %s36 = sphi 0, %s33
      %s37 = sphi 0, %s36
      %s53 = sphi 0, %s37
      %s57 = sphi 0, %s57
      %s59 = sphi 0, %s57
      %s60 = sphi 0, %s59
      %s74 = sphi 0, %s60
      %s78 = sphi 0, %s78
      %s80 = sphi 0, %s78
      %s81 = sphi 0, %s80
      %s95 = sphi 0, %s81
      %s99 = sphi 0, %s99
      %s101 = sphi 0, %s99
      %s102 = sphi 0, %s101
      %s116 = sphi 0, %s102
      %s120 = sphi 0, %s120
      %s122 = sphi 0, %s120
      %s123 = sphi 0, %s122
      %s137 = sphi 0, %s123
      %s141 = sphi 0, %s141
      %s143 = sphi 0, %s141
      %s144 = sphi 0, %s143
      %s158 = sphi 0, %s144
      %s162 = sphi 0, %s162
      %s164 = sphi 0, %s162
      %s165 = sphi 0, %s164
      %s179 = sphi 0, %s165
      %s183 = sphi 0, %s183
      %s185 = sphi 0, %s183
      %s186 = sphi 0, %s185
      %s200 = sphi 0, %s186
      %s204 = sphi 0, %s204
      %s206 = sphi 0, %s204
      %s207 = sphi 0, %s206
      %s221 = sphi 0, %s207
      %s227 = sphi 0, %s229
      %s230 = sphi 0, %s227
      %s231 = sphi 0, %s230
      %s247 = sphi 0, %s231
    $region4: #{tpu_custom_call.1} parent=1 // loop_header_branch
      %26 = sbr.rel (%p24) target = $region8
    $region5: #{tpu_custom_call.1} parent=1 // loop_body
      %s28 = ssub.s32 %s23, 1
      %s29 = ssub.s32 %s23, 2
      %s30 = sadd.s32 %s23, 1
      %s31 = ssub.s32 %s23, %s30
      %p32 = scmp.eq.s32.totalorder %s31, 0
      %s34 = sadd.s32 %s33, 1
      %s35 = scalar_select %p32, %s33, %s34
      %p38 = pneg %p32
      %p39 = scmp.eq.s32.totalorder %s23, 1
      %p40 = por %p38, %p39
      %p41 = scmp.ne.s32.totalorder %s33, %s36
      %p42 = scmp.eq.s32.totalorder %s23, 0
      %p43 = por %p41, %p42
      %p44 = scmp.ne.s32.totalorder %s33, %s36
      %p45 = scmp.eq.s32.totalorder %s28, 1
      %p46 = por %p44, %p45
      %p47 = scmp.ne.s32.totalorder %s36, %s37
      %p48 = scmp.eq.s32.totalorder %s28, 0
      %p49 = por %p47, %p48
      %p50 = scmp.ne.s32.totalorder %s36, %s37
      %p51 = scmp.eq.s32.totalorder %s29, 1
      %p52 = por %p50, %p51
      %p54 = scmp.ne.s32.totalorder %s37, %s53
      %p55 = scmp.eq.s32.totalorder %s29, 0
      %p56 = por %p54, %p55
      %s58 = sadd.s32 %s57, 1
      %p61 = scmp.eq.s32.totalorder %s23, 1
      %p62 = scmp.ne.s32.totalorder %s57, %s59
      %p63 = scmp.eq.s32.totalorder %s23, 0
      %p64 = por %p62, %p63
      %p65 = scmp.ne.s32.totalorder %s57, %s59
      %p66 = scmp.eq.s32.totalorder %s28, 1
      %p67 = por %p65, %p66
      %p68 = scmp.ne.s32.totalorder %s59, %s60
      %p69 = scmp.eq.s32.totalorder %s28, 0
      %p70 = por %p68, %p69
      %p71 = scmp.ne.s32.totalorder %s59, %s60
      %p72 = scmp.eq.s32.totalorder %s29, 1
      %p73 = por %p71, %p72
      %p75 = scmp.ne.s32.totalorder %s60, %s74
      %p76 = scmp.eq.s32.totalorder %s29, 0
      %p77 = por %p75, %p76
      %s79 = sadd.s32 %s78, 1
      %p82 = scmp.eq.s32.totalorder %s23, 1
      %p83 = scmp.ne.s32.totalorder %s78, %s80
      %p84 = scmp.eq.s32.totalorder %s23, 0
      %p85 = por %p83, %p84
      %p86 = scmp.ne.s32.totalorder %s78, %s80
      %p87 = scmp.eq.s32.totalorder %s28, 1
      %p88 = por %p86, %p87
      %p89 = scmp.ne.s32.totalorder %s80, %s81
      %p90 = scmp.eq.s32.totalorder %s28, 0
      %p91 = por %p89, %p90
      %p92 = scmp.ne.s32.totalorder %s80, %s81
      %p93 = scmp.eq.s32.totalorder %s29, 1
      %p94 = por %p92, %p93
      %p96 = scmp.ne.s32.totalorder %s81, %s95
      %p97 = scmp.eq.s32.totalorder %s29, 0
      %p98 = por %p96, %p97
      %s100 = sadd.s32 %s99, 1
      %p103 = scmp.eq.s32.totalorder %s23, 1
      %p104 = scmp.ne.s32.totalorder %s99, %s101
      %p105 = scmp.eq.s32.totalorder %s23, 0
      %p106 = por %p104, %p105
      %p107 = scmp.ne.s32.totalorder %s99, %s101
      %p108 = scmp.eq.s32.totalorder %s28, 1
      %p109 = por %p107, %p108
      %p110 = scmp.ne.s32.totalorder %s101, %s102
      %p111 = scmp.eq.s32.totalorder %s28, 0
      %p112 = por %p110, %p111
      %p113 = scmp.ne.s32.totalorder %s101, %s102
      %p114 = scmp.eq.s32.totalorder %s29, 1
      %p115 = por %p113, %p114
      %p117 = scmp.ne.s32.totalorder %s102, %s116
      %p118 = scmp.eq.s32.totalorder %s29, 0
      %p119 = por %p117, %p118
      %s121 = sadd.s32 %s120, 1
      %p124 = scmp.eq.s32.totalorder %s23, 1
      %p125 = scmp.ne.s32.totalorder %s120, %s122
      %p126 = scmp.eq.s32.totalorder %s23, 0
      %p127 = por %p125, %p126
      %p128 = scmp.ne.s32.totalorder %s120, %s122
      %p129 = scmp.eq.s32.totalorder %s28, 1
      %p130 = por %p128, %p129
      %p131 = scmp.ne.s32.totalorder %s122, %s123
      %p132 = scmp.eq.s32.totalorder %s28, 0
      %p133 = por %p131, %p132
      %p134 = scmp.ne.s32.totalorder %s122, %s123
      %p135 = scmp.eq.s32.totalorder %s29, 1
      %p136 = por %p134, %p135
      %p138 = scmp.ne.s32.totalorder %s123, %s137
      %p139 = scmp.eq.s32.totalorder %s29, 0
      %p140 = por %p138, %p139
      %s142 = sadd.s32 %s141, 1
      %p145 = scmp.eq.s32.totalorder %s23, 1
      %p146 = scmp.ne.s32.totalorder %s141, %s143
      %p147 = scmp.eq.s32.totalorder %s23, 0
      %p148 = por %p146, %p147
      %p149 = scmp.ne.s32.totalorder %s141, %s143
      %p150 = scmp.eq.s32.totalorder %s28, 1
      %p151 = por %p149, %p150
      %p152 = scmp.ne.s32.totalorder %s143, %s144
      %p153 = scmp.eq.s32.totalorder %s28, 0
      %p154 = por %p152, %p153
      %p155 = scmp.ne.s32.totalorder %s143, %s144
      %p156 = scmp.eq.s32.totalorder %s29, 1
      %p157 = por %p155, %p156
      %p159 = scmp.ne.s32.totalorder %s144, %s158
      %p160 = scmp.eq.s32.totalorder %s29, 0
      %p161 = por %p159, %p160
      %s163 = sadd.s32 %s162, 1
      %p166 = scmp.eq.s32.totalorder %s23, 1
      %p167 = scmp.ne.s32.totalorder %s162, %s164
      %p168 = scmp.eq.s32.totalorder %s23, 0
      %p169 = por %p167, %p168
      %p170 = scmp.ne.s32.totalorder %s162, %s164
      %p171 = scmp.eq.s32.totalorder %s28, 1
      %p172 = por %p170, %p171
      %p173 = scmp.ne.s32.totalorder %s164, %s165
      %p174 = scmp.eq.s32.totalorder %s28, 0
      %p175 = por %p173, %p174
      %p176 = scmp.ne.s32.totalorder %s164, %s165
      %p177 = scmp.eq.s32.totalorder %s29, 1
      %p178 = por %p176, %p177
      %p180 = scmp.ne.s32.totalorder %s165, %s179
      %p181 = scmp.eq.s32.totalorder %s29, 0
      %p182 = por %p180, %p181
      %s184 = sadd.s32 %s183, 1
      %p187 = scmp.eq.s32.totalorder %s23, 1
      %p188 = scmp.ne.s32.totalorder %s183, %s185
      %p189 = scmp.eq.s32.totalorder %s23, 0
      %p190 = por %p188, %p189
      %p191 = scmp.ne.s32.totalorder %s183, %s185
      %p192 = scmp.eq.s32.totalorder %s28, 1
      %p193 = por %p191, %p192
      %p194 = scmp.ne.s32.totalorder %s185, %s186
      %p195 = scmp.eq.s32.totalorder %s28, 0
      %p196 = por %p194, %p195
      %p197 = scmp.ne.s32.totalorder %s185, %s186
      %p198 = scmp.eq.s32.totalorder %s29, 1
      %p199 = por %p197, %p198
      %p201 = scmp.ne.s32.totalorder %s186, %s200
      %p202 = scmp.eq.s32.totalorder %s29, 0
      %p203 = por %p201, %p202
      %s205 = sadd.s32 %s204, 1
      %p208 = scmp.eq.s32.totalorder %s23, 1
      %p209 = scmp.ne.s32.totalorder %s204, %s206
      %p210 = scmp.eq.s32.totalorder %s23, 0
      %p211 = por %p209, %p210
      %p212 = scmp.ne.s32.totalorder %s204, %s206
      %p213 = scmp.eq.s32.totalorder %s28, 1
      %p214 = por %p212, %p213
      %p215 = scmp.ne.s32.totalorder %s206, %s207
      %p216 = scmp.eq.s32.totalorder %s28, 0
      %p217 = por %p215, %p216
      %p218 = scmp.ne.s32.totalorder %s206, %s207
      %p219 = scmp.eq.s32.totalorder %s29, 1
      %p220 = por %p218, %p219
      %p222 = scmp.ne.s32.totalorder %s207, %s221
      %p223 = scmp.eq.s32.totalorder %s29, 0
      %p224 = por %p222, %p223
      %s225 = ssub.s32 %s23, %s30
      %p226 = scmp.eq.s32.totalorder %s225, 0
      %s228 = sadd.s32 %s227, 1
      %s229 = scalar_select %p226, %s227, %s228
      %p232 = pneg %p226
      %p233 = scmp.eq.s32.totalorder %s23, 1
      %p234 = por %p232, %p233
      %p235 = scmp.ne.s32.totalorder %s227, %s230
      %p236 = scmp.eq.s32.totalorder %s23, 0
      %p237 = por %p235, %p236
      %p238 = scmp.ne.s32.totalorder %s227, %s230
      %p239 = scmp.eq.s32.totalorder %s28, 1
      %p240 = por %p238, %p239
      %p241 = scmp.ne.s32.totalorder %s230, %s231
      %p242 = scmp.eq.s32.totalorder %s28, 0
      %p243 = por %p241, %p242
      %p244 = scmp.ne.s32.totalorder %s230, %s231
      %p245 = scmp.eq.s32.totalorder %s29, 1
      %p246 = por %p244, %p245
      %p248 = scmp.ne.s32.totalorder %s231, %s247
      %p249 = scmp.eq.s32.totalorder %s29, 0
      %p250 = por %p248, %p249
      %p251 = scmp.le.s32.totalorder 1, %s23
      %p252 = scmp.lt.s32.totalorder %s23, 3
      %p253 = pnand %p251, %p252
      %p254 = pneg %p253
      // Predicated region
      $region9: #{tpu_custom_call.1} parent=5 // pred_check
        _
      $region10: #{tpu_custom_call.1} parent=5 // pred_check_branch
        %256 = sbr.rel (%p253) target = $region12
      $region11: #{tpu_custom_call.1} parent=5 // pred_region
        %s257 = ssub.s32 %s23, 1
        // Predicated region
        $region13: #{tpu_custom_call.1} parent=11 // pred_check
          %p258 = pneg %p70
        $region14: #{tpu_custom_call.1} parent=11 // pred_check_branch
          %260 = sbr.rel (%p258) target = $region16
        $region15: #{tpu_custom_call.1} parent=11 // pred_region
          %s262 = ssub.s32 1024, 1024
          %263 = vsyncadd [#allocation6], %s262
          %s264 = sshll.u32 [#allocation5], 4
          %s265 = int_to_ptr.vmem [resolvable:$true] %s264
          %270 = dma.hbm_to_vmem [thread:$0]  %s1, 1024, %s265, [#allocation6], 256, 256, 16
        $region16: #{tpu_custom_call.1} parent=11 // pred_fallthru
          _
        // Predicated region
        $region17: #{tpu_custom_call.1} parent=11 // pred_check
          %p271 = pneg %p91
        $region18: #{tpu_custom_call.1} parent=11 // pred_check_branch
          %273 = sbr.rel (%p271) target = $region20
        $region19: #{tpu_custom_call.1} parent=11 // pred_region
          _
        $region20: #{tpu_custom_call.1} parent=11 // pred_fallthru
          _
        // Predicated region
        $region21: #{tpu_custom_call.1} parent=11 // pred_check
          %p274 = pneg %p112
        $region22: #{tpu_custom_call.1} parent=11 // pred_check_branch
          %276 = sbr.rel (%p274) target = $region24
        $region23: #{tpu_custom_call.1} parent=11 // pred_region
          %s278 = ssub.s32 4096, 4096
          %279 = vsyncadd [#allocation6], %s278
          %s280 = sshll.u32 [#allocation7], 4
          %s281 = int_to_ptr.vmem [resolvable:$true] %s280
          %286 = dma.hbm_to_vmem [thread:$0]  %s3, 4096, %s281, [#allocation6], 128, 128, 8
        $region24: #{tpu_custom_call.1} parent=11 // pred_fallthru
          _
        // Predicated region
        $region25: #{tpu_custom_call.1} parent=11 // pred_check
          %p287 = pneg %p133
        $region26: #{tpu_custom_call.1} parent=11 // pred_check_branch
          %289 = sbr.rel (%p287) target = $region28
        $region27: #{tpu_custom_call.1} parent=11 // pred_region
          _
        $region28: #{tpu_custom_call.1} parent=11 // pred_fallthru
          _
        // Predicated region
        $region29: #{tpu_custom_call.1} parent=11 // pred_check
          %p290 = pneg %p154
        $region30: #{tpu_custom_call.1} parent=11 // pred_check_branch
          %292 = sbr.rel (%p290) target = $region32
        $region31: #{tpu_custom_call.1} parent=11 // pred_region
          %s294 = ssub.s32 2048, 2048
          %295 = vsyncadd [#allocation9], %s294
          %s296 = sshll.u32 [#allocation8], 4
          %s297 = int_to_ptr.vmem [resolvable:$true] %s296
          %302 = dma.hbm_to_vmem [thread:$0]  %s5, 2048, %s297, [#allocation9], 128, 128, 8
        $region32: #{tpu_custom_call.1} parent=11 // pred_fallthru
          _
        // Predicated region
        $region33: #{tpu_custom_call.1} parent=11 // pred_check
          %p303 = pneg %p175
        $region34: #{tpu_custom_call.1} parent=11 // pred_check_branch
          %305 = sbr.rel (%p303) target = $region36
        $region35: #{tpu_custom_call.1} parent=11 // pred_region
          _
        $region36: #{tpu_custom_call.1} parent=11 // pred_fallthru
          _
        // Predicated region
        $region37: #{tpu_custom_call.1} parent=11 // pred_check
          %p306 = pneg %p196
        $region38: #{tpu_custom_call.1} parent=11 // pred_check_branch
          %308 = sbr.rel (%p306) target = $region40
        $region39: #{tpu_custom_call.1} parent=11 // pred_region
          %s310 = ssub.s32 2048, 2048
          %311 = vsyncadd [#allocation9], %s310
          %s312 = sshll.u32 [#allocation10], 4
          %s313 = int_to_ptr.vmem [resolvable:$true] %s312
          %318 = dma.hbm_to_vmem [thread:$0]  %s7, 2048, %s313, [#allocation9], 128, 128, 8
        $region40: #{tpu_custom_call.1} parent=11 // pred_fallthru
          _
        // Predicated region
        $region41: #{tpu_custom_call.1} parent=11 // pred_check
          %p319 = pneg %p217
        $region42: #{tpu_custom_call.1} parent=11 // pred_check_branch
          %321 = sbr.rel (%p319) target = $region44
        $region43: #{tpu_custom_call.1} parent=11 // pred_region
          _
        $region44: #{tpu_custom_call.1} parent=11 // pred_fallthru
          _
      $region12: #{tpu_custom_call.1} parent=5 // pred_fallthru
        _
      %p322 = scmp.lt.s32.totalorder %s23, 2
      // Predicated region
      $region45: #{tpu_custom_call.1} parent=5 // pred_check
        %p323 = pneg %p322
      $region46: #{tpu_custom_call.1} parent=5 // pred_check_branch
        %325 = sbr.rel (%p323) target = $region48
      $region47: #{tpu_custom_call.1} parent=5 // pred_region
        // Predicated region
        $region49: #{tpu_custom_call.1} parent=47 // pred_check
          %p326 = pneg %p43
        $region50: #{tpu_custom_call.1} parent=47 // pred_check_branch
          %328 = sbr.rel (%p326) target = $region52
        $region51: #{tpu_custom_call.1} parent=47 // pred_region
          %s329 = sand.u32 %s33, 1
          %s330 = scalar_lea.sflag [#allocation3], %s329
          %s331 = sand.u32 %s33, 1
          %s332 = smul.addr %s331, 8
          %s333 = scalar_lea.vmem [#allocation2], %s332
          %s335 = ssub.s32 128, 128
          %336 = vsyncadd %s330, %s335
          %s337 = smul.addr %s23, 128
          %s338 = scalar_lea.hbm %s0, %s337
          %s340 = sshll.u32 %s333, 4
          %s341 = int_to_ptr.vmem [resolvable:$true] %s340
          %343 = dma.hbm_to_vmem [thread:$0]  %s338, 128, %s341, %s330
        $region52: #{tpu_custom_call.1} parent=47 // pred_fallthru
          _
      $region48: #{tpu_custom_call.1} parent=5 // pred_fallthru
        _
      %p344 = scmp.le.s32.totalorder 1, %s23
      %p345 = scmp.lt.s32.totalorder %s23, 3
      %p346 = pnand %p344, %p345
      %p347 = pneg %p346
      // Predicated region
      $region53: #{tpu_custom_call.1} parent=5 // pred_check
        _
      $region54: #{tpu_custom_call.1} parent=5 // pred_check_branch
        %349 = sbr.rel (%p346) target = $region56
      $region55: #{tpu_custom_call.1} parent=5 // pred_region
        %s350 = ssub.s32 %s23, 1
        %s351 = sand.u32 %s36, 1
        %s352 = scalar_lea.sflag [#allocation3], %s351
        %s353 = sand.u32 %s36, 1
        %s354 = smul.addr %s353, 8
        %s355 = scalar_lea.vmem [#allocation2], %s354
        // Predicated region
        $region57: #{tpu_custom_call.1} parent=55 // pred_check
          %p356 = pneg %p49
        $region58: #{tpu_custom_call.1} parent=55 // pred_check_branch
          %358 = sbr.rel (%p356) target = $region60
        $region59: #{tpu_custom_call.1} parent=55 // pred_region
          %359 = dma.done %s352, 128
        $region60: #{tpu_custom_call.1} parent=55 // pred_fallthru
          _
        // Predicated region
        $region61: #{tpu_custom_call.1} parent=55 // pred_check
          %p360 = pneg %p70
        $region62: #{tpu_custom_call.1} parent=55 // pred_check_branch
          %362 = sbr.rel (%p360) target = $region64
        $region63: #{tpu_custom_call.1} parent=55 // pred_region
          %363 = dma.done [#allocation6], 1024
        $region64: #{tpu_custom_call.1} parent=55 // pred_fallthru
          _
        // Predicated region
        $region65: #{tpu_custom_call.1} parent=55 // pred_check
          %p364 = pneg %p112
        $region66: #{tpu_custom_call.1} parent=55 // pred_check_branch
          %366 = sbr.rel (%p364) target = $region68
        $region67: #{tpu_custom_call.1} parent=55 // pred_region
          %367 = dma.done [#allocation6], 4096
        $region68: #{tpu_custom_call.1} parent=55 // pred_fallthru
          _
        // Predicated region
        $region69: #{tpu_custom_call.1} parent=55 // pred_check
          %p368 = pneg %p154
        $region70: #{tpu_custom_call.1} parent=55 // pred_check_branch
          %370 = sbr.rel (%p368) target = $region72
        $region71: #{tpu_custom_call.1} parent=55 // pred_region
          %371 = dma.done [#allocation9], 2048
        $region72: #{tpu_custom_call.1} parent=55 // pred_fallthru
          _
        // Predicated region
        $region73: #{tpu_custom_call.1} parent=55 // pred_check
          %p372 = pneg %p196
        $region74: #{tpu_custom_call.1} parent=55 // pred_check_branch
          %374 = sbr.rel (%p372) target = $region76
        $region75: #{tpu_custom_call.1} parent=55 // pred_region
          %375 = dma.done [#allocation9], 2048
        $region76: #{tpu_custom_call.1} parent=55 // pred_fallthru
          _
        %s376 = sand.u32 %s36, 1
        %s377 = scalar_lea.sflag [#allocation3], %s376
        %s378 = sand.u32 %s36, 1
        %s379 = smul.addr %s378, 8
        %s380 = scalar_lea.vmem [#allocation2], %s379
        %p381 = pneg %p49
        %p382 = pneg %p46
        %p383 = pneg %p70
        %p384 = pneg %p67
        %p385 = pneg %p91
        %p386 = pneg %p88
        %p387 = pneg %p112
        %p388 = pneg %p109
        %p389 = pneg %p133
        %p390 = pneg %p130
        %p391 = pneg %p154
        %p392 = pneg %p151
        %p393 = pneg %p175
        %p394 = pneg %p172
        %p395 = pneg %p196
        %p396 = pneg %p193
        %p397 = pneg %p217
        %p398 = pneg %p214
        %p399 = pneg %p243
        %p400 = pneg %p240
        %s401 = sand.u32 %s230, 1
        %s402 = scalar_lea.sflag [#allocation4], %s401
        %s403 = sand.u32 %s230, 1
        %s404 = smul.addr %s403, 8
        %s405 = scalar_lea.vmem [#allocation11], %s404
        %v406 = vld [vmem:[%s355] sm:$0xff]
        %v407 = vld [vmem:[#allocation5] sm:$0xff]
        %v408 = vld [vmem:[#allocation5 + $0x8] sm:$0xff]
        %v409 = vld [vmem:[#allocation5 + $0x10] sm:$0xff]
        %v410 = vld [vmem:[#allocation5 + $0x18] sm:$0xff]
        %v411 = vld [vmem:[#allocation5 + $0x20] sm:$0xff]
        %v412 = vld [vmem:[#allocation5 + $0x28] sm:$0xff]
        %v413 = vld [vmem:[#allocation5 + $0x30] sm:$0xff]
        %v414 = vld [vmem:[#allocation5 + $0x38] sm:$0xff]
        %v415 = vld [vmem:[%s2] sm:$0x3]
        %v417 = vlaneseq
        %v418 = vshrl.u32 %v417, 7
        %v419 = vsub.s32 0, %v418
        %v420 = vrot.slane %v415, %v419
        %v421 = vlaneseq
        %v422 = vshrl.u32 %v421, 7
        %v423 = vsub.s32 1, %v422
        %v424 = vrot.slane %v415, %v423
        %vm427 = vcmask 261120
        %v429 = vsel %vm427, %v406, 0
        %431 = vmatprep.subr.mxu0 0.0
        %432 = vmatpush1.msra.mxu0 0.0
        %433 = vmatprep.subr.mxu0 0.0
        %434 = vmatpush1.msra.mxu0 0.0
        %435 = vmatprep.subr.mxu0 0.0
        %436 = vmatpush1.msra.mxu0 0.0
        %437 = vmatprep.subr.mxu0 0.0
        %438 = vmatpush1.msra.mxu0 0.0
        %439 = vmatprep.subr.mxu0 0.0
        %440 = vmatpush1.msra.mxu0 0.0
        %441 = vmatprep.subr.mxu0 0.0
        %442 = vmatpush1.msra.mxu0 0.0
        %443 = vmatprep.subr.mxu0 0.0
        %444 = vmatpush1.msra.mxu0 0.0
        %445 = vmatprep.subr.mxu0 0.0
        %446 = vmatpush1.msra.mxu0 0.0
        %447 = vmatprep.subr.mxu0 0.0
        %448 = vmatpush1.msra.mxu0 0.0
        %449 = vmatprep.subr.mxu0 0.0
        %450 = vmatpush1.msra.mxu0 0.0
        %451 = vmatprep.subr.mxu0 0.0
        %452 = vmatpush1.msra.mxu0 0.0
        %453 = vmatprep.subr.mxu0 0.0
        %454 = vmatpush1.msra.mxu0 0.0
        %455 = vmatprep.subr.mxu0 %v414
        %456 = vmatpush1.msra.mxu0 %v413
        %457 = vmatprep.subr.mxu0 %v412
        %458 = vmatpush1.msra.mxu0 %v411
        %459 = vmatprep.subr.mxu0 %v410
        %460 = vmatpush1.msra.mxu0 %v409
        %461 = vmatprep.subr.mxu0 %v408
        %462 = vmatpush1.msra.mxu0 %v407
        %463 = vmatprep.subr.mxu0 0.0
        %464 = vmatpush2.msra.mxu0 0.0
        %465 = vmatprep.subr.mxu0 0.0
        %466 = vmatpush2.msra.mxu0 0.0
        %467 = vmatprep.subr.mxu0 0.0
        %468 = vmatpush2.msra.mxu0 0.0
        %469 = vmatprep.subr.mxu0 0.0
        %470 = vmatpush2.msra.mxu0 0.0
        %471 = vmatprep.subr.mxu0 0.0
        %472 = vmatpush2.msra.mxu0 0.0
        %473 = vmatprep.subr.mxu0 0.0
        %474 = vmatpush2.msra.mxu0 0.0
        %475 = vmatprep.subr.mxu0 0.0
        %476 = vmatpush2.msra.mxu0 0.0
        %477 = vmatprep.subr.mxu0 0.0
        %478 = vmatpush2.msra.mxu0 0.0
        %479 = vmatprep.subr.mxu0 0.0
        %480 = vmatpush2.msra.mxu0 0.0
        %481 = vmatprep.subr.mxu0 0.0
        %482 = vmatpush2.msra.mxu0 0.0
        %483 = vmatprep.subr.mxu0 0.0
        %484 = vmatpush2.msra.mxu0 0.0
        %485 = vmatprep.subr.mxu0 0.0
        %486 = vmatpush2.msra.mxu0 0.0
        %487 = vmatprep.subr.mxu0 0.0
        %488 = vmatpush2.msra.mxu0 0.0
        %489 = vmatprep.subr.mxu0 0.0
        %490 = vmatpush2.msra.mxu0 0.0
        %491 = vmatprep.subr.mxu0 0.0
        %492 = vmatpush2.msra.mxu0 0.0
        %493 = vmatprep.subr.mxu0 0.0
        %494 = vmatpush2.msra.mxu0 0.0
        %495 = vmatprep.mubr.f32.mxu0 0.0
        %496 = vmatmul.mubr.f32.gmra.mxu0 %v429
        %v497 = vpop.f32.mrf.mxu0
        %v498 = vadd.f32 %v420, %v497
        %v499 = vpop.f32.mrf.mxu0
        %v500 = vadd.f32 %v424, %v499
        %501 = vdwg.mxu0
        %v502 = vmax.f32 %v498, 0.0
        %v503 = vmax.f32 %v500, 0.0
        %v504 = vld [vmem:[#allocation7] sm:$0xff]
        %v505 = vld [vmem:[#allocation7 + $0x8] sm:$0xff]
        %v506 = vld [vmem:[#allocation7 + $0x10] sm:$0xff]
        %v507 = vld [vmem:[#allocation7 + $0x18] sm:$0xff]
        %v508 = vld [vmem:[#allocation7 + $0x20] sm:$0xff]
        %v509 = vld [vmem:[#allocation7 + $0x28] sm:$0xff]
        %v510 = vld [vmem:[#allocation7 + $0x30] sm:$0xff]
        %v511 = vld [vmem:[#allocation7 + $0x38] sm:$0xff]
        %v512 = vld [vmem:[#allocation7 + $0x40] sm:$0xff]
        %v513 = vld [vmem:[#allocation7 + $0x48] sm:$0xff]
        %v514 = vld [vmem:[#allocation7 + $0x50] sm:$0xff]
        %v515 = vld [vmem:[#allocation7 + $0x58] sm:$0xff]
        %v516 = vld [vmem:[#allocation7 + $0x60] sm:$0xff]
        %v517 = vld [vmem:[#allocation7 + $0x68] sm:$0xff]
        %v518 = vld [vmem:[#allocation7 + $0x70] sm:$0xff]
        %v519 = vld [vmem:[#allocation7 + $0x78] sm:$0xff]
        %v520 = vld [vmem:[#allocation7 + $0x80] sm:$0xff]
        %v521 = vld [vmem:[#allocation7 + $0x88] sm:$0xff]
        %v522 = vld [vmem:[#allocation7 + $0x90] sm:$0xff]
        %v523 = vld [vmem:[#allocation7 + $0x98] sm:$0xff]
        %v524 = vld [vmem:[#allocation7 + $0xa0] sm:$0xff]
        %v525 = vld [vmem:[#allocation7 + $0xa8] sm:$0xff]
        %v526 = vld [vmem:[#allocation7 + $0xb0] sm:$0xff]
        %v527 = vld [vmem:[#allocation7 + $0xb8] sm:$0xff]
        %v528 = vld [vmem:[#allocation7 + $0xc0] sm:$0xff]
        %v529 = vld [vmem:[#allocation7 + $0xc8] sm:$0xff]
        %v530 = vld [vmem:[#allocation7 + $0xd0] sm:$0xff]
        %v531 = vld [vmem:[#allocation7 + $0xd8] sm:$0xff]
        %v532 = vld [vmem:[#allocation7 + $0xe0] sm:$0xff]
        %v533 = vld [vmem:[#allocation7 + $0xe8] sm:$0xff]
        %v534 = vld [vmem:[#allocation7 + $0xf0] sm:$0xff]
        %v535 = vld [vmem:[#allocation7 + $0xf8] sm:$0xff]
        %v536 = vld [vmem:[%s4] sm:$0x1]
        %v538 = vlaneseq
        %v539 = vshrl.u32 %v538, 7
        %v540 = vsub.s32 0, %v539
        %v541 = vrot.slane %v536, %v540
        %543 = vmatprep.subr.mxu0 0.0
        %544 = vmatpush1.msra.mxu0 %v519
        %545 = vmatprep.subr.mxu0 0.0
        %546 = vmatpush1.msra.mxu0 %v518
        %547 = vmatprep.subr.mxu0 0.0
        %548 = vmatpush1.msra.mxu0 %v517
        %549 = vmatprep.subr.mxu0 0.0
        %550 = vmatpush1.msra.mxu0 %v516
        %551 = vmatprep.subr.mxu0 0.0
        %552 = vmatpush1.msra.mxu0 %v515
        %553 = vmatprep.subr.mxu0 0.0
        %554 = vmatpush1.msra.mxu0 %v514
        %555 = vmatprep.subr.mxu0 0.0
        %556 = vmatpush1.msra.mxu0 %v513
        %557 = vmatprep.subr.mxu0 0.0
        %558 = vmatpush1.msra.mxu0 %v512
        %559 = vmatprep.subr.mxu0 0.0
        %560 = vmatpush1.msra.mxu0 %v511
        %561 = vmatprep.subr.mxu0 0.0
        %562 = vmatpush1.msra.mxu0 %v510
        %563 = vmatprep.subr.mxu0 0.0
        %564 = vmatpush1.msra.mxu0 %v509
        %565 = vmatprep.subr.mxu0 0.0
        %566 = vmatpush1.msra.mxu0 %v508
        %567 = vmatprep.subr.mxu0 0.0
        %568 = vmatpush1.msra.mxu0 %v507
        %569 = vmatprep.subr.mxu0 0.0
        %570 = vmatpush1.msra.mxu0 %v506
        %571 = vmatprep.subr.mxu0 0.0
        %572 = vmatpush1.msra.mxu0 %v505
        %573 = vmatprep.subr.mxu0 0.0
        %574 = vmatpush1.msra.mxu0 %v504
        %575 = vmatprep.subr.mxu0 0.0
        %576 = vmatpush2.msra.mxu0 %v535
        %577 = vmatprep.subr.mxu0 0.0
        %578 = vmatpush2.msra.mxu0 %v534
        %579 = vmatprep.subr.mxu0 0.0
        %580 = vmatpush2.msra.mxu0 %v533
        %581 = vmatprep.subr.mxu0 0.0
        %582 = vmatpush2.msra.mxu0 %v532
        %583 = vmatprep.subr.mxu0 0.0
        %584 = vmatpush2.msra.mxu0 %v531
        %585 = vmatprep.subr.mxu0 0.0
        %586 = vmatpush2.msra.mxu0 %v530
        %587 = vmatprep.subr.mxu0 0.0
        %588 = vmatpush2.msra.mxu0 %v529
        %589 = vmatprep.subr.mxu0 0.0
        %590 = vmatpush2.msra.mxu0 %v528
        %591 = vmatprep.subr.mxu0 0.0
        %592 = vmatpush2.msra.mxu0 %v527
        %593 = vmatprep.subr.mxu0 0.0
        %594 = vmatpush2.msra.mxu0 %v526
        %595 = vmatprep.subr.mxu0 0.0
        %596 = vmatpush2.msra.mxu0 %v525
        %597 = vmatprep.subr.mxu0 0.0
        %598 = vmatpush2.msra.mxu0 %v524
        %599 = vmatprep.subr.mxu0 0.0
        %600 = vmatpush2.msra.mxu0 %v523
        %601 = vmatprep.subr.mxu0 0.0
        %602 = vmatpush2.msra.mxu0 %v522
        %603 = vmatprep.subr.mxu0 0.0
        %604 = vmatpush2.msra.mxu0 %v521
        %605 = vmatprep.subr.mxu0 0.0
        %606 = vmatpush2.msra.mxu0 %v520
        %607 = vmatprep.mubr.f32.mxu0 %v503
        %608 = vmatmul.mubr.f32.gmra.mxu0 %v502
        %v609 = vpop.f32.mrf.mxu0
        %v610 = vadd.f32 %v541, %v609
        %v611 = vpop.f32.mrf.mxu0
        %612 = vdwg.mxu0
        %v613 = vmax.f32 %v610, 0.0
        %v614 = vld [vmem:[#allocation8] sm:$0xff]
        %v615 = vld [vmem:[#allocation8 + $0x8] sm:$0xff]
        %v616 = vld [vmem:[#allocation8 + $0x10] sm:$0xff]
        %v617 = vld [vmem:[#allocation8 + $0x18] sm:$0xff]
        %v618 = vld [vmem:[#allocation8 + $0x20] sm:$0xff]
        %v619 = vld [vmem:[#allocation8 + $0x28] sm:$0xff]
        %v620 = vld [vmem:[#allocation8 + $0x30] sm:$0xff]
        %v621 = vld [vmem:[#allocation8 + $0x38] sm:$0xff]
        %v622 = vld [vmem:[#allocation8 + $0x40] sm:$0xff]
        %v623 = vld [vmem:[#allocation8 + $0x48] sm:$0xff]
        %v624 = vld [vmem:[#allocation8 + $0x50] sm:$0xff]
        %v625 = vld [vmem:[#allocation8 + $0x58] sm:$0xff]
        %v626 = vld [vmem:[#allocation8 + $0x60] sm:$0xff]
        %v627 = vld [vmem:[#allocation8 + $0x68] sm:$0xff]
        %v628 = vld [vmem:[#allocation8 + $0x70] sm:$0xff]
        %v629 = vld [vmem:[#allocation8 + $0x78] sm:$0xff]
        %v630 = vld [vmem:[%s6] sm:$0x1]
        %v632 = vlaneseq
        %v633 = vshrl.u32 %v632, 7
        %v634 = vsub.s32 0, %v633
        %v635 = vrot.slane %v630, %v634
        %637 = vmatprep.subr.mxu0 0.0
        %638 = vmatpush1.msra.mxu0 %v629
        %639 = vmatprep.subr.mxu0 0.0
        %640 = vmatpush1.msra.mxu0 %v628
        %641 = vmatprep.subr.mxu0 0.0
        %642 = vmatpush1.msra.mxu0 %v627
        %643 = vmatprep.subr.mxu0 0.0
        %644 = vmatpush1.msra.mxu0 %v626
        %645 = vmatprep.subr.mxu0 0.0
        %646 = vmatpush1.msra.mxu0 %v625
        %647 = vmatprep.subr.mxu0 0.0
        %648 = vmatpush1.msra.mxu0 %v624
        %649 = vmatprep.subr.mxu0 0.0
        %650 = vmatpush1.msra.mxu0 %v623
        %651 = vmatprep.subr.mxu0 0.0
        %652 = vmatpush1.msra.mxu0 %v622
        %653 = vmatprep.subr.mxu0 0.0
        %654 = vmatpush1.msra.mxu0 %v621
        %655 = vmatprep.subr.mxu0 0.0
        %656 = vmatpush1.msra.mxu0 %v620
        %657 = vmatprep.subr.mxu0 0.0
        %658 = vmatpush1.msra.mxu0 %v619
        %659 = vmatprep.subr.mxu0 0.0
        %660 = vmatpush1.msra.mxu0 %v618
        %661 = vmatprep.subr.mxu0 0.0
        %662 = vmatpush1.msra.mxu0 %v617
        %663 = vmatprep.subr.mxu0 0.0
        %664 = vmatpush1.msra.mxu0 %v616
        %665 = vmatprep.subr.mxu0 0.0
        %666 = vmatpush1.msra.mxu0 %v615
        %667 = vmatprep.subr.mxu0 0.0
        %668 = vmatpush1.msra.mxu0 %v614
        %669 = vmatprep.subr.mxu0 0.0
        %670 = vmatpush2.msra.mxu0 0.0
        %671 = vmatprep.subr.mxu0 0.0
        %672 = vmatpush2.msra.mxu0 0.0
        %673 = vmatprep.subr.mxu0 0.0
        %674 = vmatpush2.msra.mxu0 0.0
        %675 = vmatprep.subr.mxu0 0.0
        %676 = vmatpush2.msra.mxu0 0.0
        %677 = vmatprep.subr.mxu0 0.0
        %678 = vmatpush2.msra.mxu0 0.0
        %679 = vmatprep.subr.mxu0 0.0
        %680 = vmatpush2.msra.mxu0 0.0
        %681 = vmatprep.subr.mxu0 0.0
        %682 = vmatpush2.msra.mxu0 0.0
        %683 = vmatprep.subr.mxu0 0.0
        %684 = vmatpush2.msra.mxu0 0.0
        %685 = vmatprep.subr.mxu0 0.0
        %686 = vmatpush2.msra.mxu0 0.0
        %687 = vmatprep.subr.mxu0 0.0
        %688 = vmatpush2.msra.mxu0 0.0
        %689 = vmatprep.subr.mxu0 0.0
        %690 = vmatpush2.msra.mxu0 0.0
        %691 = vmatprep.subr.mxu0 0.0
        %692 = vmatpush2.msra.mxu0 0.0
        %693 = vmatprep.subr.mxu0 0.0
        %694 = vmatpush2.msra.mxu0 0.0
        %695 = vmatprep.subr.mxu0 0.0
        %696 = vmatpush2.msra.mxu0 0.0
        %697 = vmatprep.subr.mxu0 0.0
        %698 = vmatpush2.msra.mxu0 0.0
        %699 = vmatprep.subr.mxu0 0.0
        %700 = vmatpush2.msra.mxu0 0.0
        %701 = vmatprep.mubr.f32.mxu0 0.0
        %702 = vmatmul.mubr.f32.gmra.mxu0 %v613
        %v703 = vpop.f32.mrf.mxu0
        %v704 = vadd.f32 %v635, %v703
        %v705 = vpop.f32.mrf.mxu0
        %706 = vdwg.mxu0
        %v707 = vmax.f32 %v704, 0.0
        %v708 = vld [vmem:[#allocation10] sm:$0xff]
        %v709 = vld [vmem:[#allocation10 + $0x8] sm:$0xff]
        %v710 = vld [vmem:[#allocation10 + $0x10] sm:$0xff]
        %v711 = vld [vmem:[#allocation10 + $0x18] sm:$0xff]
        %v712 = vld [vmem:[#allocation10 + $0x20] sm:$0xff]
        %v713 = vld [vmem:[#allocation10 + $0x28] sm:$0xff]
        %v714 = vld [vmem:[#allocation10 + $0x30] sm:$0xff]
        %v715 = vld [vmem:[#allocation10 + $0x38] sm:$0xff]
        %v716 = vld [vmem:[#allocation10 + $0x40] sm:$0xff]
        %v717 = vld [vmem:[#allocation10 + $0x48] sm:$0xff]
        %v718 = vld [vmem:[#allocation10 + $0x50] sm:$0xff]
        %v719 = vld [vmem:[#allocation10 + $0x58] sm:$0xff]
        %v720 = vld [vmem:[#allocation10 + $0x60] sm:$0xff]
        %v721 = vld [vmem:[#allocation10 + $0x68] sm:$0xff]
        %v722 = vld [vmem:[#allocation10 + $0x70] sm:$0xff]
        %v723 = vld [vmem:[#allocation10 + $0x78] sm:$0xff]
        %v724 = vld [vmem:[%s8] sm:$0x1]
        %v726 = vlaneseq
        %v727 = vshrl.u32 %v726, 7
        %v728 = vsub.s32 0, %v727
        %v729 = vrot.slane %v724, %v728
        %731 = vmatprep.subr.mxu0 0.0
        %732 = vmatpush1.msra.mxu0 %v723
        %733 = vmatprep.subr.mxu0 0.0
        %734 = vmatpush1.msra.mxu0 %v722
        %735 = vmatprep.subr.mxu0 0.0
        %736 = vmatpush1.msra.mxu0 %v721
        %737 = vmatprep.subr.mxu0 0.0
        %738 = vmatpush1.msra.mxu0 %v720
        %739 = vmatprep.subr.mxu0 0.0
        %740 = vmatpush1.msra.mxu0 %v719
        %741 = vmatprep.subr.mxu0 0.0
        %742 = vmatpush1.msra.mxu0 %v718
        %743 = vmatprep.subr.mxu0 0.0
        %744 = vmatpush1.msra.mxu0 %v717
        %745 = vmatprep.subr.mxu0 0.0
        %746 = vmatpush1.msra.mxu0 %v716
        %747 = vmatprep.subr.mxu0 0.0
        %748 = vmatpush1.msra.mxu0 %v715
        %749 = vmatprep.subr.mxu0 0.0
        %750 = vmatpush1.msra.mxu0 %v714
        %751 = vmatprep.subr.mxu0 0.0
        %752 = vmatpush1.msra.mxu0 %v713
        %753 = vmatprep.subr.mxu0 0.0
        %754 = vmatpush1.msra.mxu0 %v712
        %755 = vmatprep.subr.mxu0 0.0
        %756 = vmatpush1.msra.mxu0 %v711
        %757 = vmatprep.subr.mxu0 0.0
        %758 = vmatpush1.msra.mxu0 %v710
        %759 = vmatprep.subr.mxu0 0.0
        %760 = vmatpush1.msra.mxu0 %v709
        %761 = vmatprep.subr.mxu0 0.0
        %762 = vmatpush1.msra.mxu0 %v708
        %763 = vmatprep.subr.mxu0 0.0
        %764 = vmatpush2.msra.mxu0 0.0
        %765 = vmatprep.subr.mxu0 0.0
        %766 = vmatpush2.msra.mxu0 0.0
        %767 = vmatprep.subr.mxu0 0.0
        %768 = vmatpush2.msra.mxu0 0.0
        %769 = vmatprep.subr.mxu0 0.0
        %770 = vmatpush2.msra.mxu0 0.0
        %771 = vmatprep.subr.mxu0 0.0
        %772 = vmatpush2.msra.mxu0 0.0
        %773 = vmatprep.subr.mxu0 0.0
        %774 = vmatpush2.msra.mxu0 0.0
        %775 = vmatprep.subr.mxu0 0.0
        %776 = vmatpush2.msra.mxu0 0.0
        %777 = vmatprep.subr.mxu0 0.0
        %778 = vmatpush2.msra.mxu0 0.0
        %779 = vmatprep.subr.mxu0 0.0
        %780 = vmatpush2.msra.mxu0 0.0
        %781 = vmatprep.subr.mxu0 0.0
        %782 = vmatpush2.msra.mxu0 0.0
        %783 = vmatprep.subr.mxu0 0.0
        %784 = vmatpush2.msra.mxu0 0.0
        %785 = vmatprep.subr.mxu0 0.0
        %786 = vmatpush2.msra.mxu0 0.0
        %787 = vmatprep.subr.mxu0 0.0
        %788 = vmatpush2.msra.mxu0 0.0
        %789 = vmatprep.subr.mxu0 0.0
        %790 = vmatpush2.msra.mxu0 0.0
        %791 = vmatprep.subr.mxu0 0.0
        %792 = vmatpush2.msra.mxu0 0.0
        %793 = vmatprep.subr.mxu0 0.0
        %794 = vmatpush2.msra.mxu0 0.0
        %795 = vmatprep.mubr.f32.mxu0 0.0
        %796 = vmatmul.mubr.f32.gmra.mxu0 %v707
        %v797 = vpop.f32.mrf.mxu0
        %v798 = vadd.f32 %v729, %v797
        %v799 = vpop.f32.mrf.mxu0
        %800 = vdwg.mxu0
        %801 = vst [vmem:[%s405] sm:$0xff] %v798
        %s802 = sand.u32 %s230, 1
        %s803 = scalar_lea.sflag [#allocation4], %s802
        %s804 = sand.u32 %s230, 1
        %s805 = smul.addr %s804, 8
        %s806 = scalar_lea.vmem [#allocation11], %s805
        // Predicated region
        $region77: #{tpu_custom_call.1} parent=55 // pred_check
          %p807 = pneg %p240
        $region78: #{tpu_custom_call.1} parent=55 // pred_check_branch
          %809 = sbr.rel (%p807) target = $region80
        $region79: #{tpu_custom_call.1} parent=55 // pred_region
          %s811 = ssub.s32 128, 128
          %812 = vsyncadd %s803, %s811
          %s813 = smul.addr %s28, 128
          %s814 = scalar_lea.hbm %s9, %s813
          %s816 = sshll.u32 %s806, 4
          %s817 = int_to_ptr.vmem [resolvable:$true] %s816
          %819 = dma.vmem_to_hbm [thread:$0]  %s817, 128, %s814, %s803
        $region80: #{tpu_custom_call.1} parent=55 // pred_fallthru
          _
      $region56: #{tpu_custom_call.1} parent=5 // pred_fallthru
        _
      %p820 = scmp.le.s32.totalorder 2, %s23
      // Predicated region
      $region81: #{tpu_custom_call.1} parent=5 // pred_check
        %p821 = pneg %p820
      $region82: #{tpu_custom_call.1} parent=5 // pred_check_branch
        %823 = sbr.rel (%p821) target = $region84
      $region83: #{tpu_custom_call.1} parent=5 // pred_region
        %s824 = ssub.s32 %s23, 2
        // Predicated region
        $region85: #{tpu_custom_call.1} parent=83 // pred_check
          %p825 = pneg %p246
        $region86: #{tpu_custom_call.1} parent=83 // pred_check_branch
          %827 = sbr.rel (%p825) target = $region88
        $region87: #{tpu_custom_call.1} parent=83 // pred_region
          %s828 = sand.u32 %s231, 1
          %s829 = scalar_lea.sflag [#allocation4], %s828
          %s830 = sand.u32 %s231, 1
          %s831 = smul.addr %s830, 8
          %s832 = scalar_lea.vmem [#allocation11], %s831
          %833 = dma.done %s829, 128
        $region88: #{tpu_custom_call.1} parent=83 // pred_fallthru
          _
      $region84: #{tpu_custom_call.1} parent=5 // pred_fallthru
        _
    $region6: #{tpu_custom_call.1} parent=1 // loop_footer
      %s27 = sadd.s32 1, %s23
    $region7: #{tpu_custom_call.1} parent=1 // loop_footer_branch
      %22 = sbr.rel target = $region3
    $region8: #{tpu_custom_call.1} parent=1 // loop_exit
      _
    %834 = vsyncpa [#allocation3], 1
    %s835 = scalar_lea.sflag [#allocation3], 1
    %836 = vsyncpa %s835, 1
    %837 = vsyncpa [#allocation6], 1
    %838 = vsyncpa [#allocation9], 1
    %839 = vsyncpa [#allocation4], 1
    %s840 = scalar_lea.sflag [#allocation4], 1
    %841 = vsyncpa %s840, 1

</llo_original>
